<compile_context>
chip_gen: v6e
topology: v6e:2x2x1
jax: 0.10.0
libtpu: 0.0.40
codegen_flags: <defaults>
</compile_context>

<pallas_src>
import jax
import jax.numpy as jnp
from jax import lax
from jax.experimental import pallas as pl
from jax.experimental.pallas import tpu as pltpu


# Total bytes streamed per grid step across all inputs (f32-equivalent).
_TARGET_STREAM_BYTES_PER_STEP = 4 * 1024 * 1024


def _choose_width(total, last_dim):
    """Pick a lane-dense width (multiple of 128) that divides `total`."""
    candidates = [w for w in (1024, 512, 384, 256, 128) if total % w == 0]
    if not candidates:
        # TODO(synk): no multiple-of-128 divisor of the element count; fall back
        # to the natural trailing dim (lanes underutilized when last_dim < 128).
        return last_dim
    for w in candidates:                 # descending: widest W that keeps >= 8 rows
        if total // w >= 8:
            return w
    return candidates[-1]                # tiny tensors: smallest W -> most rows


def _make_sumsq_kernel(n_pairs, tile_rows, width, rows_total, n_blocks,
                       n_per_split, needs_mask):
    """sum over pairs of sum((a-b)^2), accumulated in a VMEM f32 block."""

    def kernel(*refs):
        in_refs = refs[: 2 * n_pairs]
        out_ref = refs[2 * n_pairs]
        acc_ref = refs[2 * n_pairs + 1]
        c = pl.program_id(0)     # core-split axis ("parallel")
        t = pl.program_id(1)     # reduction axis ("arbitrary")

        @pl.when(t == 0)
        def _init():
            acc_ref[...] = jnp.zeros_like(acc_ref)

        contrib = None
        for p in range(n_pairs):
            a = in_refs[2 * p][...].astype(jnp.float32)
            b = in_refs[2 * p + 1][...].astype(jnp.float32)
            d = a - b
            sq = d * d
            contrib = sq if contrib is None else contrib + sq

        if needs_mask:
            # Zero rows past the end of the array (partial last block, or a
            # phantom block created by the 2-way core split).
            bi = c * n_per_split + t
            row = bi * tile_rows + lax.broadcasted_iota(
                jnp.int32, (tile_rows, width), 0)
            contrib = jnp.where(row < rows_total, contrib, 0.0)

        acc_ref[...] += contrib

        @pl.when(t == n_per_split - 1)
        def _finalize():
            out_ref[...] = jnp.reshape(jnp.sum(acc_ref[...]), (1, 1, 1))

    return kernel


def _sum_squared_diff(pairs):
    """sum_p sum((a_p - b_p)^2) as an f32 scalar.

    All pairs must have the same element count (they share one block geometry
    and are streamed through a single pallas_call).
    """
    total = pairs[0][0].size
    for a, b in pairs:
        assert a.shape == b.shape, (a.shape, b.shape)
        assert a.size == total, (a.size, total)

    last_dim = pairs[0][0].shape[-1] if pairs[0][0].ndim else 1
    width = _choose_width(total, last_dim)
    rows_total = total // width

    n_pairs = len(pairs)
    per_input_block_bytes = max(
        128 * 4 * 8, _TARGET_STREAM_BYTES_PER_STEP // (2 * n_pairs))
    if rows_total < 8:
        tile_rows = rows_total            # block second-minor == full dim
    else:
        max_tile_rows = max(8, (per_input_block_bytes // (width * 4) // 8) * 8)
        tile_rows = min(max_tile_rows, (rows_total // 8) * 8)

    n_blocks = -(-rows_total // tile_rows)
    n_split = 2 if n_blocks >= 2 else 1   # v7x: one half per TensorCore
    n_per_split = -(-n_blocks // n_split)
    needs_mask = (rows_total % tile_rows != 0) or (n_split * n_per_split != n_blocks)

    # Metadata-only reshapes of contiguous arrays: no HBM copies.
    flat_inputs = []
    for a, b in pairs:
        flat_inputs.append(a.reshape(rows_total, width))
        flat_inputs.append(b.reshape(rows_total, width))

    def in_index_map(c, t):
        # Clamp phantom blocks of the split into range; they are masked to 0.
        return (jnp.minimum(c * n_per_split + t, n_blocks - 1), 0)

    kernel = _make_sumsq_kernel(n_pairs, tile_rows, width, rows_total,
                                n_blocks, n_per_split, needs_mask)

    partials = pl.pallas_call(
        kernel,
        out_shape=jax.ShapeDtypeStruct((n_split, 1, 1), jnp.float32),
        grid_spec=pltpu.PrefetchScalarGridSpec(
            num_scalar_prefetch=0,
            grid=(n_split, n_per_split),
            in_specs=[pl.BlockSpec((tile_rows, width), in_index_map)
                      for _ in flat_inputs],
            out_specs=pl.BlockSpec((1, 1, 1), lambda c, t: (c, 0, 0)),
            scratch_shapes=[pltpu.VMEM((tile_rows, width), jnp.float32)],
        ),
        compiler_params=pltpu.CompilerParams(
            dimension_semantics=("parallel", "arbitrary"),
            vmem_limit_bytes=32 * 1024 * 1024),
    )(*flat_inputs)

    return jnp.sum(partials)


def mse_loss(a, b):
    """torch.nn.MSELoss() equivalent: mean((a - b)**2) over all elements."""
    return _sum_squared_diff([(a, b)]) / jnp.float32(a.size)


# --------------------------- SVD regularization glue --------------------------

def svd_regularization(output, target, rank):
    """Mirror of CustomLoss.svd_regularization (rank=-1 drops the last singular value)."""
    bsz, num_heads, seq_len, dim = output.shape
    out = jnp.transpose(output, (0, 2, 1, 3)).reshape(
        bsz, seq_len, dim * num_heads).astype(jnp.float32)
    tgt = jnp.transpose(target, (0, 2, 1, 3)).reshape(
        bsz, seq_len, dim * num_heads).astype(jnp.float32)

    # TODO(synk): SVD decomposition has no Pallas equivalent; it stays in XLA.
    u_o, s_o, vh_o = jnp.linalg.svd(out, full_matrices=False)
    u_t, s_t, vh_t = jnp.linalg.svd(tgt, full_matrices=False)
    v_o = jnp.swapaxes(vh_o, -2, -1)
    v_t = jnp.swapaxes(vh_t, -2, -1)

    r = rank  # matches torch slicing [:, :rank] (rank == -1 -> drop last)
    s_o = s_o[:, :r].astype(jnp.bfloat16)
    s_t = s_t[:, :r].astype(jnp.bfloat16)
    u_o = u_o[:, :, :r].astype(jnp.bfloat16)
    v_o = v_o[:, :, :r].astype(jnp.bfloat16)
    u_t = u_t[:, :, :r].astype(jnp.bfloat16)
    v_t = v_t[:, :, :r].astype(jnp.bfloat16)

    # u @ diag(s) @ v^T  (glue; tiny matmuls, not the hot path)
    # TODO(synk): could fuse reconstruction + squared-diff into one Pallas kernel
    # to avoid the HBM round-trip of the reconstructed tensors.
    out_rec = jnp.matmul(u_o, s_o[:, :, None] * jnp.swapaxes(v_o, -2, -1))
    tgt_rec = jnp.matmul(u_t, s_t[:, :, None] * jnp.swapaxes(v_t, -2, -1))
    return out_rec, tgt_rec


# ------------------------------- CustomLoss API -------------------------------

def custom_loss_forward(model_output, targets, *, num_layers, rank=-1,
                        use_svd=False):
    if rank == 0:
        rank = -1  # mirrors the PyTorch module's constructor remapping
    total_loss = jnp.float32(0.0)
    for i in range(num_layers):
        output1, output2 = model_output[i]
        target1, target2 = targets[i]
        if use_svd:
            output1, target1 = svd_regularization(output1, target1, rank)
            output2, target2 = svd_regularization(output2, target2, rank)
        if output1.size == output2.size:
            # Fuse both MSE terms of this layer into a single pallas_call.
            ss = _sum_squared_diff([(output1, target1), (output2, target2)])
            total_loss = total_loss + ss / jnp.float32(output1.size)
        else:
            total_loss = (total_loss
                          + mse_loss(output1, target1)
                          + mse_loss(output2, target2))
    return total_loss


# ------------------------------------ main ------------------------------------

if __name__ == "__main__":
    key = jax.random.PRNGKey(0)
    num_layers = 2
    bsz, num_heads, seq_len, dim = 2, 4, 8, 16   # small synthetic shapes

    model_output = []
    targets = []
    for _ in range(num_layers):
        key, k1, k2, k3, k4 = jax.random.split(key, 5)
        shape = (bsz, num_heads, seq_len, dim)
        model_output.append((
            jax.random.normal(k1, shape, dtype=jnp.float32),
            jax.random.normal(k2, shape, dtype=jnp.float32),
        ))
        targets.append((
            jax.random.normal(k3, shape, dtype=jnp.float32),
            jax.random.normal(k4, shape, dtype=jnp.float32),
        ))

    loss = custom_loss_forward(model_output, targets,
                               num_layers=num_layers, use_svd=False)
    loss = jax.block_until_ready(loss)

    # sanity check against plain-JAX reference
    ref = jnp.float32(0.0)
    for i in range(num_layers):
        for o, t in zip(model_output[i], targets[i]):
            ref = ref + jnp.mean((o - t) ** 2)
    assert jnp.allclose(loss, ref, rtol=1e-5, atol=1e-5), (loss, ref)

    print("KERNEL_OK")
</pallas_src>

<mosaic_0001>
module attributes {stable_mosaic.version = 11 : i64} {
  func.func @kernel(%arg0: i32, %arg1: i32, %arg2: memref<8x128xf32, #tpu.memory_space<vmem>>, %arg3: memref<8x128xf32, #tpu.memory_space<vmem>>, %arg4: memref<8x128xf32, #tpu.memory_space<vmem>>, %arg5: memref<8x128xf32, #tpu.memory_space<vmem>>, %arg6: memref<1x1x1xf32, #tpu.memory_space<vmem>>, %arg7: memref<8x128xf32, #tpu.memory_space<vmem>>) attributes {dimension_semantics = [#tpu.dimension_semantics<parallel>, #tpu.dimension_semantics<arbitrary>], iteration_bounds = array<i64: 1, 1>, scalar_prefetch = 0 : i64, scratch_operands = 1 : i64, tpu.core_type = #tpu.core_type<tc>, window_params = [{transform_indices = @transform_0, window_bounds = array<i64: 8, 128>}, {transform_indices = @transform_1, window_bounds = array<i64: 8, 128>}, {transform_indices = @transform_2, window_bounds = array<i64: 8, 128>}, {transform_indices = @transform_3, window_bounds = array<i64: 8, 128>}, {transform_indices = @transform_4, window_bounds = array<i64: 1, 1, 1>}]} {
    %c0_i32 = arith.constant 0 : i32
    %0 = arith.cmpi eq, %arg1, %c0_i32 : i32
    %1 = arith.extui %0 : i1 to i32
    %c0_i32_0 = arith.constant 0 : i32
    %2 = arith.cmpi ne, %1, %c0_i32_0 : i32
    scf.if %2 {
      %cst = arith.constant 0.000000e+00 : f32
      %18 = vector.broadcast %cst : f32 to vector<8x128xf32>
      %c0_14 = arith.constant 0 : index
      %c0_15 = arith.constant 0 : index
      %19 = vector.load %arg7[%c0_14, %c0_15] : memref<8x128xf32, #tpu.memory_space<vmem>>, vector<8x128xf32>
      tpu.vector_store %arg7[%c0_14, %c0_15], %18 {strides = array<i32>} : memref<8x128xf32, #tpu.memory_space<vmem>>, vector<8x128xf32>,
    } else {
    }
    %c0 = arith.constant 0 : index
    %c0_1 = arith.constant 0 : index
    %3 = vector.load %arg2[%c0, %c0_1] : memref<8x128xf32, #tpu.memory_space<vmem>>, vector<8x128xf32>
    %c0_2 = arith.constant 0 : index
    %c0_3 = arith.constant 0 : index
    %4 = vector.load %arg3[%c0_2, %c0_3] : memref<8x128xf32, #tpu.memory_space<vmem>>, vector<8x128xf32>
    %5 = arith.subf %3, %4 : vector<8x128xf32>
    %6 = arith.mulf %5, %5 : vector<8x128xf32>
    %c0_4 = arith.constant 0 : index
    %c0_5 = arith.constant 0 : index
    %7 = vector.load %arg4[%c0_4, %c0_5] : memref<8x128xf32, #tpu.memory_space<vmem>>, vector<8x128xf32>
    %c0_6 = arith.constant 0 : index
    %c0_7 = arith.constant 0 : index
    %8 = vector.load %arg5[%c0_6, %c0_7] : memref<8x128xf32, #tpu.memory_space<vmem>>, vector<8x128xf32>
    %9 = arith.subf %7, %8 : vector<8x128xf32>
    %10 = arith.mulf %9, %9 : vector<8x128xf32>
    %11 = arith.addf %6, %10 : vector<8x128xf32>
    %c0_8 = arith.constant 0 : index
    %c0_9 = arith.constant 0 : index
    %12 = vector.load %arg7[%c0_8, %c0_9] : memref<8x128xf32, #tpu.memory_space<vmem>>, vector<8x128xf32>
    %13 = arith.addf %12, %11 : vector<8x128xf32>
    %c0_10 = arith.constant 0 : index
    %c0_11 = arith.constant 0 : index
    %14 = vector.load %arg7[%c0_10, %c0_11] : memref<8x128xf32, #tpu.memory_space<vmem>>, vector<8x128xf32>
    tpu.vector_store %arg7[%c0_10, %c0_11], %13 {strides = array<i32>} : memref<8x128xf32, #tpu.memory_space<vmem>>, vector<8x128xf32>,
    %c0_i32_12 = arith.constant 0 : i32
    %15 = arith.cmpi eq, %arg1, %c0_i32_12 : i32
    %16 = arith.extui %15 : i1 to i32
    %c0_i32_13 = arith.constant 0 : i32
    %17 = arith.cmpi ne, %16, %c0_i32_13 : i32
    scf.if %17 {
      %c0_14 = arith.constant 0 : index
      %c0_15 = arith.constant 0 : index
      %18 = vector.load %arg7[%c0_14, %c0_15] : memref<8x128xf32, #tpu.memory_space<vmem>>, vector<8x128xf32>
      %19 = vector.shape_cast %18 : vector<8x128xf32> to vector<1x8x128xf32>
      %cst = arith.constant dense<0.000000e+00> : vector<1xf32>
      %20 = vector.multi_reduction <add>, %19, %cst [1, 2] : vector<1x8x128xf32> to vector<1xf32>
      %21 = vector.shape_cast %20 : vector<1xf32> to vector<1x1x1xf32>
      %22 = vector.extract %21[0, 0, 0] : f32 from vector<1x1x1xf32>
      %23 = vector.broadcast %22 : f32 to vector<1x1x1xf32>
      %c0_16 = arith.constant 0 : index
      %c0_17 = arith.constant 0 : index
      %c0_18 = arith.constant 0 : index
      %24 = vector.load %arg6[%c0_16, %c0_17, %c0_18] : memref<1x1x1xf32, #tpu.memory_space<vmem>>, vector<1x1x1xf32>
      tpu.vector_store %arg6[%c0_16, %c0_17, %c0_18], %23 {strides = array<i32>} : memref<1x1x1xf32, #tpu.memory_space<vmem>>, vector<1x1x1xf32>,
    } else {
    }
    return
  }
  func.func @transform_0(%arg0: i32, %arg1: i32) -> (i32, i32) {
    %c1_i32 = arith.constant 1 : i32
    %0 = arith.muli %arg0, %c1_i32 : i32
    %1 = arith.addi %0, %arg1 : i32
    %c0_i32 = arith.constant 0 : i32
    %2 = arith.minsi %1, %c0_i32 : i32
    %c0_i32_0 = arith.constant 0 : i32
    %c0_i32_1 = arith.constant 0 : i32
    return %2, %c0_i32_0 : i32, i32
  }
  func.func @transform_1(%arg0: i32, %arg1: i32) -> (i32, i32) {
    %c1_i32 = arith.constant 1 : i32
    %0 = arith.muli %arg0, %c1_i32 : i32
    %1 = arith.addi %0, %arg1 : i32
    %c0_i32 = arith.constant 0 : i32
    %2 = arith.minsi %1, %c0_i32 : i32
    %c0_i32_0 = arith.constant 0 : i32
    %c0_i32_1 = arith.constant 0 : i32
    return %2, %c0_i32_0 : i32, i32
  }
  func.func @transform_2(%arg0: i32, %arg1: i32) -> (i32, i32) {
    %c1_i32 = arith.constant 1 : i32
    %0 = arith.muli %arg0, %c1_i32 : i32
    %1 = arith.addi %0, %arg1 : i32
    %c0_i32 = arith.constant 0 : i32
    %2 = arith.minsi %1, %c0_i32 : i32
    %c0_i32_0 = arith.constant 0 : i32
    %c0_i32_1 = arith.constant 0 : i32
    return %2, %c0_i32_0 : i32, i32
  }
  func.func @transform_3(%arg0: i32, %arg1: i32) -> (i32, i32) {
    %c1_i32 = arith.constant 1 : i32
    %0 = arith.muli %arg0, %c1_i32 : i32
    %1 = arith.addi %0, %arg1 : i32
    %c0_i32 = arith.constant 0 : i32
    %2 = arith.minsi %1, %c0_i32 : i32
    %c0_i32_0 = arith.constant 0 : i32
    %c0_i32_1 = arith.constant 0 : i32
    return %2, %c0_i32_0 : i32, i32
  }
  func.func @transform_4(%arg0: i32, %arg1: i32) -> (i32, i32, i32) {
    %c0_i32 = arith.constant 0 : i32
    %c0_i32_0 = arith.constant 0 : i32
    %c0_i32_1 = arith.constant 0 : i32
    return %arg0, %c0_i32, %c0_i32_0 : i32, i32, i32
  }
}

</mosaic_0001>

<llo_original>
// kernel: tpu_custom_call.1
$region0: #{tpu_custom_call.1}
  #allocation0 [shape = 'u32[]', space=smem, size = 0x4, offset = 0x4, fixed_abs, tag = 'smem constant byte address 0x4 - core index']
  #allocation1 [shape = 'u32[144,128]{1,0:T(1,128)}', space=vmem, size = 0x12000, scoped, tag = 'internal scratch']
  #allocation2 [shape = 'f32[8,128]{1,0:T(8,128)}', space=vmem, size = 0x1000, scoped, tag = 'scratch operand']
  %s0 = inlined_call_operand.hbm [shape: f32[8,128], index: 0, kind: input, shape index: {}]
  %s1 = inlined_call_operand.hbm [shape: f32[8,128], index: 1, kind: input, shape index: {}]
  %s2 = inlined_call_operand.hbm [shape: f32[8,128], index: 2, kind: input, shape index: {}]
  %s3 = inlined_call_operand.hbm [shape: f32[8,128], index: 3, kind: input, shape index: {}]
  %s4 = inlined_call_operand.hbm [shape: f32[1,1,1], index: 4, kind: output, shape index: {}]
  %s5 = sld [smem:[#allocation0]]
  $region50: #{tpu_custom_call.1} parent=0
    _
  %s7 = ssub.s32 1, %s5
  %s8 = scalar_select 0, %s7, %s5
  $region1: #{tpu_custom_call.1} parent=0
    #allocation3 [shape = 'u8[4096]{0}', space=vmem, size = 0x1000, scoped, tag = 'input window, operand 0, single buffered']
    #allocation4 [shape = 's32[1]{0}', space=sflag, size = 0x4, scoped, tag = 'scoped memory for tpu_custom_call.1']
    #allocation5 [shape = 's32[1]{0}', space=sflag, size = 0x4, scoped, tag = 'scoped memory for tpu_custom_call.1']
    #allocation6 [shape = 'u8[4096]{0}', space=vmem, size = 0x1000, scoped, tag = 'input window, operand 1, single buffered']
    #allocation7 [shape = 's32[1]{0}', space=sflag, size = 0x4, scoped, tag = 'scoped memory for tpu_custom_call.1']
    #allocation8 [shape = 'u8[4096]{0}', space=vmem, size = 0x1000, scoped, tag = 'input window, operand 2, single buffered']
    #allocation9 [shape = 'u8[4096]{0}', space=vmem, size = 0x1000, scoped, tag = 'input window, operand 3, single buffered']
    #allocation10 [shape = 's32[1]{0}', space=sflag, size = 0x4, scoped, tag = 'scoped memory for tpu_custom_call.1']
    #allocation11 [shape = 'u8[512]{0}', space=vmem, size = 0x400, scoped, tag = 'output window, operand 0, single buffered']
    %9 = vsyncpa [#allocation4], 0
    %10 = vsyncpa [#allocation7], 0
    %11 = vsyncpa [#allocation10], 0
    %12 = vsyncpa [#allocation5], 0
    // Predicated region
    $region2: #{tpu_custom_call.1} parent=1 // pred_check
      _
    $region3: #{tpu_custom_call.1} parent=1 // pred_check_branch
      %14 = sbr.rel (0) target = $region5
    $region4: #{tpu_custom_call.1} parent=1 // pred_region
      %s15 = sadd.s32 0, 0
      %p16 = scmp.lt.s32.totalorder %s15, 0
      %s17 = scalar_select %p16, %s15, 0
      %s19 = ssub.s32 128, 128
      %20 = vsyncadd [#allocation4], %s19
      %s21 = smul.addr %s17, 128
      %s22 = scalar_lea.hbm %s0, %s21
      %s24 = sshll.u32 [#allocation3], 4
      %s25 = int_to_ptr.vmem [resolvable:$true] %s24
      %27 = dma.hbm_to_vmem [thread:$0]  %s22, 128, %s25, [#allocation4]
    $region5: #{tpu_custom_call.1} parent=1 // pred_fallthru
      _
    // Predicated region
    $region6: #{tpu_custom_call.1} parent=1 // pred_check
      _
    $region7: #{tpu_custom_call.1} parent=1 // pred_check_branch
      %29 = sbr.rel (0) target = $region9
    $region8: #{tpu_custom_call.1} parent=1 // pred_region
      %s30 = sadd.s32 0, 0
      %p31 = scmp.lt.s32.totalorder %s30, 0
      %s32 = scalar_select %p31, %s30, 0
      %s34 = ssub.s32 128, 128
      %35 = vsyncadd [#allocation7], %s34
      %s36 = smul.addr %s32, 128
      %s37 = scalar_lea.hbm %s1, %s36
      %s39 = sshll.u32 [#allocation6], 4
      %s40 = int_to_ptr.vmem [resolvable:$true] %s39
      %42 = dma.hbm_to_vmem [thread:$0]  %s37, 128, %s40, [#allocation7]
    $region9: #{tpu_custom_call.1} parent=1 // pred_fallthru
      _
    // Predicated region
    $region10: #{tpu_custom_call.1} parent=1 // pred_check
      _
    $region11: #{tpu_custom_call.1} parent=1 // pred_check_branch
      %44 = sbr.rel (0) target = $region13
    $region12: #{tpu_custom_call.1} parent=1 // pred_region
      %s45 = sadd.s32 0, 0
      %p46 = scmp.lt.s32.totalorder %s45, 0
      %s47 = scalar_select %p46, %s45, 0
      %s49 = ssub.s32 128, 128
      %50 = vsyncadd [#allocation7], %s49
      %s51 = smul.addr %s47, 128
      %s52 = scalar_lea.hbm %s2, %s51
      %s54 = sshll.u32 [#allocation8], 4
      %s55 = int_to_ptr.vmem [resolvable:$true] %s54
      %57 = dma.hbm_to_vmem [thread:$0]  %s52, 128, %s55, [#allocation7]
    $region13: #{tpu_custom_call.1} parent=1 // pred_fallthru
      _
    // Predicated region
    $region14: #{tpu_custom_call.1} parent=1 // pred_check
      _
    $region15: #{tpu_custom_call.1} parent=1 // pred_check_branch
      %59 = sbr.rel (0) target = $region17
    $region16: #{tpu_custom_call.1} parent=1 // pred_region
      %s60 = sadd.s32 0, 0
      %p61 = scmp.lt.s32.totalorder %s60, 0
      %s62 = scalar_select %p61, %s60, 0
      %s64 = ssub.s32 128, 128
      %65 = vsyncadd [#allocation10], %s64
      %s66 = smul.addr %s62, 128
      %s67 = scalar_lea.hbm %s3, %s66
      %s69 = sshll.u32 [#allocation9], 4
      %s70 = int_to_ptr.vmem [resolvable:$true] %s69
      %72 = dma.hbm_to_vmem [thread:$0]  %s67, 128, %s70, [#allocation10]
    $region17: #{tpu_custom_call.1} parent=1 // pred_fallthru
      _
    // Predicated region
    $region18: #{tpu_custom_call.1} parent=1 // pred_check
      _
    $region19: #{tpu_custom_call.1} parent=1 // pred_check_branch
      %74 = sbr.rel (0) target = $region21
    $region20: #{tpu_custom_call.1} parent=1 // pred_region
      %75 = dma.done [#allocation4], 128
    $region21: #{tpu_custom_call.1} parent=1 // pred_fallthru
      _
    // Predicated region
    $region22: #{tpu_custom_call.1} parent=1 // pred_check
      _
    $region23: #{tpu_custom_call.1} parent=1 // pred_check_branch
      %77 = sbr.rel (0) target = $region25
    $region24: #{tpu_custom_call.1} parent=1 // pred_region
      %78 = dma.done [#allocation7], 128
    $region25: #{tpu_custom_call.1} parent=1 // pred_fallthru
      _
    // Predicated region
    $region26: #{tpu_custom_call.1} parent=1 // pred_check
      _
    $region27: #{tpu_custom_call.1} parent=1 // pred_check_branch
      %80 = sbr.rel (0) target = $region29
    $region28: #{tpu_custom_call.1} parent=1 // pred_region
      %81 = dma.done [#allocation7], 128
    $region29: #{tpu_custom_call.1} parent=1 // pred_fallthru
      _
    // Predicated region
    $region30: #{tpu_custom_call.1} parent=1 // pred_check
      _
    $region31: #{tpu_custom_call.1} parent=1 // pred_check_branch
      %83 = sbr.rel (0) target = $region33
    $region32: #{tpu_custom_call.1} parent=1 // pred_region
      %84 = dma.done [#allocation10], 128
    $region33: #{tpu_custom_call.1} parent=1 // pred_fallthru
      _
    %s85 = sadd.s32 0, 0
    %p86 = scmp.lt.s32.totalorder %s85, 0
    %s87 = scalar_select %p86, %s85, 0
    %s88 = sadd.s32 0, 0
    %p89 = scmp.lt.s32.totalorder %s88, 0
    %s90 = scalar_select %p89, %s88, 0
    %s91 = sadd.s32 0, 0
    %p92 = scmp.lt.s32.totalorder %s91, 0
    %s93 = scalar_select %p92, %s91, 0
    %s94 = sadd.s32 0, 0
    %p95 = scmp.lt.s32.totalorder %s94, 0
    %s96 = scalar_select %p95, %s94, 0
    %p97 = scmp.eq.s32.totalorder 0, 0
    // Predicated region
    $region34: #{tpu_custom_call.1} parent=1 // pred_check
      %p98 = pneg %p97
    $region35: #{tpu_custom_call.1} parent=1 // pred_check_branch
      %100 = sbr.rel (%p98) target = $region37
    $region36: #{tpu_custom_call.1} parent=1 // pred_region
      %101 = vst [vmem:[#allocation2] sm:$0xff] 0.0
    $region37: #{tpu_custom_call.1} parent=1 // pred_fallthru
      _
    %v102 = vld [vmem:[#allocation3] sm:$0xff]
    %v103 = vld [vmem:[#allocation6] sm:$0xff]
    %v104 = vsub.f32 %v102, %v103
    %v105 = vmul.f32 %v104, %v104
    %v106 = vld [vmem:[#allocation8] sm:$0xff]
    %v107 = vld [vmem:[#allocation9] sm:$0xff]
    %v108 = vsub.f32 %v106, %v107
    %v109 = vmul.f32 %v108, %v108
    %v110 = vadd.f32 %v105, %v109
    %v111 = vld [vmem:[#allocation2] sm:$0xff]
    %v112 = vadd.f32 %v111, %v110
    %113 = vst [vmem:[#allocation2] sm:$0xff] %v112
    // Predicated region
    $region38: #{tpu_custom_call.1} parent=1 // pred_check
      %p114 = pneg %p97
    $region39: #{tpu_custom_call.1} parent=1 // pred_check_branch
      %116 = sbr.rel (%p114) target = $region41
    $region40: #{tpu_custom_call.1} parent=1 // pred_region
      %v117 = vld [vmem:[#allocation2] sm:$0xff]
      %118 = vadd.xlane.f32.xlu0 %v117
      %v119 = vpop.xlane.xlu0 %118
      %v120 = vrot.slane %v119, 4
      %v121 = vadd.f32 %v119, %v120
      %v122 = vrot.slane %v121, 2
      %v123 = vadd.f32 %v121, %v122
      %v124 = vrot.slane %v123, 1
      %v125 = vadd.f32 %v123, %v124
      %s126 = vtos %v125
      %v127 = vstv %s126
      %vm128 = vcmask 0
      %129 = vst.msk [vmem:[#allocation11] sm:$0x1] %vm128, %v127
    $region41: #{tpu_custom_call.1} parent=1 // pred_fallthru
      _
    // Predicated region
    $region42: #{tpu_custom_call.1} parent=1 // pred_check
      _
    $region43: #{tpu_custom_call.1} parent=1 // pred_check_branch
      %131 = sbr.rel (0) target = $region45
    $region44: #{tpu_custom_call.1} parent=1 // pred_region
      %s133 = ssub.s32 16, 16
      %134 = vsyncadd [#allocation5], %s133
      %s136 = sshll.u32 [#allocation11], 4
      %s137 = int_to_ptr.vmem [resolvable:$true] %s136
      %139 = dma.vmem_to_hbm [thread:$0]  %s137, 16, %s4, [#allocation5]
    $region45: #{tpu_custom_call.1} parent=1 // pred_fallthru
      _
    // Predicated region
    $region46: #{tpu_custom_call.1} parent=1 // pred_check
      _
    $region47: #{tpu_custom_call.1} parent=1 // pred_check_branch
      %141 = sbr.rel (0) target = $region49
    $region48: #{tpu_custom_call.1} parent=1 // pred_region
      %142 = dma.done [#allocation5], 16
    $region49: #{tpu_custom_call.1} parent=1 // pred_fallthru
      _
    %143 = vsyncpa [#allocation4], 1
    %144 = vsyncpa [#allocation7], 1
    %145 = vsyncpa [#allocation10], 1
    %146 = vsyncpa [#allocation5], 1

</llo_original>
